<compile_context>
chip_gen: v6e
topology: v6e:2x2x1
jax: 0.10.0
libtpu: 0.0.40
codegen_flags: <defaults>
</compile_context>

<pallas_src>
import functools

import jax
import jax.numpy as jnp
import numpy as np
from jax import lax
from jax.experimental import pallas as pl
from jax.experimental.pallas import tpu as pltpu


_LOG_CLAMP = -100.0          # torch.nn.BCELoss clamps log terms at -100
_LANES = 128
_SUBLANES = 8
_DEFAULT_BLOCK_ROWS = 512    # 512*128 f32 elems per input per block


def _disc_loss_kernel(n_ref, x_ref, out_ref):
    """One grid step.

    n_ref:   SMEM (1,) int32   -- true batch size (for masking the padding)
    x_ref:   VMEM (3, BR, 128) -- [real; wrong; fake], zero padded
    out_ref: VMEM (8, 128)     -- per-block partial sum in row 0, zeros elsewhere
    """
    blk_rows = x_ref.shape[1]

    real = x_ref[0]
    wrong = x_ref[1]
    fake = x_ref[2]

    # EUP logs + VPU clamps, combined with VPU adds -> ONE array to reduce.
    comb = (jnp.maximum(jnp.log(real), _LOG_CLAMP)
            + 0.5 * (jnp.maximum(jnp.log(1.0 - wrong), _LOG_CLAMP)
                     + jnp.maximum(jnp.log(1.0 - fake), _LOG_CLAMP)))

    # Mask out the zero-padded tail (padding is 0.0: log(0) clamps to -100 for
    # the `real` row, so it must be excluded; the other rows contribute 0).
    row = lax.broadcasted_iota(jnp.int32, comb.shape, 0)
    lane = lax.broadcasted_iota(jnp.int32, comb.shape, 1)
    gidx = (pl.program_id(0) * blk_rows + row) * _LANES + lane
    comb = jnp.where(gidx < n_ref[0], comb, 0.0)

    # Single per-block reduction: collapse rows -> (1, 128) lane vector.
    partial = jnp.sum(comb, axis=0, keepdims=True)

    # Lane/sublane-dense (8, 128) store: partial in row 0, zeros elsewhere, so
    # the wrapper can simply sum the whole partials array.
    out_rows = lax.broadcasted_iota(jnp.int32, out_ref.shape, 0)
    out_ref[...] = jnp.where(out_rows == 0, partial, 0.0)


def _round_up(a, b):
    return (a + b - 1) // b * b


@functools.partial(jax.jit, static_argnames=("block_rows",))
def discriminator_loss_forward(real, wrong, fake, block_rows=_DEFAULT_BLOCK_ROWS):
    """real/wrong/fake: (batch,) probabilities in (0, 1). Returns scalar loss."""
    n = real.shape[0]

    rows = (n + _LANES - 1) // _LANES
    blk_rows = min(block_rows, _round_up(rows, _SUBLANES))
    rows_total = _round_up(rows, blk_rows)
    num_blocks = rows_total // blk_rows
    n_pad = rows_total * _LANES

    # One consolidated operand: (3, n) -> zero-pad -> (3, rows_total, 128).
    x = jnp.stack([real, wrong, fake]).astype(jnp.float32)
    if n_pad != n:
        x = jnp.pad(x, ((0, 0), (0, n_pad - n)))
    x = x.reshape(3, rows_total, _LANES)

    n_arr = jnp.array([n], dtype=jnp.int32)  # SMEM scalar via prefetch

    partials = pl.pallas_call(
        _disc_loss_kernel,
        out_shape=jax.ShapeDtypeStruct((num_blocks * _SUBLANES, _LANES),
                                       jnp.float32),
        grid_spec=pltpu.PrefetchScalarGridSpec(
            num_scalar_prefetch=1,
            grid=(num_blocks,),
            in_specs=[
                pl.BlockSpec((3, blk_rows, _LANES),
                             lambda i, n_ref: (0, i, 0)),
            ],
            out_specs=pl.BlockSpec((_SUBLANES, _LANES),
                                   lambda i, n_ref: (i, 0)),
        ),
        compiler_params=pltpu.CompilerParams(
            dimension_semantics=("parallel",)),
    )(n_arr, x)

    # Tiny final combine (independent of how many TCs produced the partials).
    return -jnp.sum(partials) / jnp.float32(n)


def _reference(real, wrong, fake):
    """Pure-JAX transcription of the PyTorch forward (for verification)."""
    def bce(p, y):
        lp = jnp.maximum(jnp.log(p), _LOG_CLAMP)
        l1p = jnp.maximum(jnp.log(1.0 - p), _LOG_CLAMP)
        return -jnp.mean(y * lp + (1.0 - y) * l1p)

    ones = jnp.ones_like(real)
    zeros = jnp.zeros_like(real)
    return bce(real, ones) + 0.5 * (bce(wrong, zeros) + bce(fake, zeros))


def _make_inputs(n, key):
    kr, kw, kf = jax.random.split(key, 3)
    # BCELoss inputs must be probabilities in (0, 1): use sigmoid of normals.
    real = jax.nn.sigmoid(jax.random.normal(kr, (n,), jnp.float32))
    wrong = jax.nn.sigmoid(jax.random.normal(kw, (n,), jnp.float32))
    fake = jax.nn.sigmoid(jax.random.normal(kf, (n,), jnp.float32))
    return real, wrong, fake


if __name__ == "__main__":
    key = jax.random.PRNGKey(0)
    k1, k2 = jax.random.split(key)

    # Small batch (typical usage of the PyTorch module); single-block path.
    real, wrong, fake = _make_inputs(24, k1)
    out = jax.block_until_ready(discriminator_loss_forward(real, wrong, fake))
    ref = _reference(real, wrong, fake)
    np.testing.assert_allclose(np.asarray(out), np.asarray(ref),
                               rtol=1e-5, atol=1e-6)

    # Slightly larger batch with a small forced block: exercises the grid,
    # the padding mask across blocks, and the parallel per-block partials.
    real, wrong, fake = _make_inputs(2000, k2)
    out = jax.block_until_ready(
        discriminator_loss_forward(real, wrong, fake, block_rows=8))
    ref = _reference(real, wrong, fake)
    np.testing.assert_allclose(np.asarray(out), np.asarray(ref),
                               rtol=1e-5, atol=1e-5)

    print("KERNEL_OK")
</pallas_src>

<mosaic_0001>
module attributes {stable_mosaic.version = 11 : i64} {
  func.func @_disc_loss_kernel(%arg0: i32, %arg1: memref<1xi32, #tpu.memory_space<smem>>, %arg2: memref<3x8x128xf32, #tpu.memory_space<vmem>>, %arg3: memref<8x128xf32, #tpu.memory_space<vmem>>) attributes {dimension_semantics = [#tpu.dimension_semantics<parallel>], iteration_bounds = array<i64: 1>, scalar_prefetch = 1 : i64, scratch_operands = 0 : i64, tpu.core_type = #tpu.core_type<tc>, window_params = [{transform_indices = @transform_0, window_bounds = array<i64: 3, 8, 128>}, {transform_indices = @transform_1, window_bounds = array<i64: 8, 128>}]} {
    %c0 = arith.constant 0 : index
    %c0_0 = arith.constant 0 : index
    %c0_1 = arith.constant 0 : index
    %0 = vector.load %arg2[%c0, %c0_0, %c0_1] : memref<3x8x128xf32, #tpu.memory_space<vmem>>, vector<1x8x128xf32>
    %1 = vector.shape_cast %0 : vector<1x8x128xf32> to vector<8x128xf32>
    %c1 = arith.constant 1 : index
    %c0_2 = arith.constant 0 : index
    %c0_3 = arith.constant 0 : index
    %2 = vector.load %arg2[%c1, %c0_2, %c0_3] : memref<3x8x128xf32, #tpu.memory_space<vmem>>, vector<1x8x128xf32>
    %3 = vector.shape_cast %2 : vector<1x8x128xf32> to vector<8x128xf32>
    %c2 = arith.constant 2 : index
    %c0_4 = arith.constant 0 : index
    %c0_5 = arith.constant 0 : index
    %4 = vector.load %arg2[%c2, %c0_4, %c0_5] : memref<3x8x128xf32, #tpu.memory_space<vmem>>, vector<1x8x128xf32>
    %5 = vector.shape_cast %4 : vector<1x8x128xf32> to vector<8x128xf32>
    %6 = math.log %1 : vector<8x128xf32>
    %cst = arith.constant -1.000000e+02 : f32
    %7 = vector.broadcast %cst : f32 to vector<8x128xf32>
    %8 = arith.maximumf %6, %7 : vector<8x128xf32>
    %cst_6 = arith.constant 1.000000e+00 : f32
    %9 = vector.broadcast %cst_6 : f32 to vector<8x128xf32>
    %10 = arith.subf %9, %3 : vector<8x128xf32>
    %11 = math.log %10 : vector<8x128xf32>
    %cst_7 = arith.constant -1.000000e+02 : f32
    %12 = vector.broadcast %cst_7 : f32 to vector<8x128xf32>
    %13 = arith.maximumf %11, %12 : vector<8x128xf32>
    %cst_8 = arith.constant 1.000000e+00 : f32
    %14 = vector.broadcast %cst_8 : f32 to vector<8x128xf32>
    %15 = arith.subf %14, %5 : vector<8x128xf32>
    %16 = math.log %15 : vector<8x128xf32>
    %cst_9 = arith.constant -1.000000e+02 : f32
    %17 = vector.broadcast %cst_9 : f32 to vector<8x128xf32>
    %18 = arith.maximumf %16, %17 : vector<8x128xf32>
    %19 = arith.addf %13, %18 : vector<8x128xf32>
    %cst_10 = arith.constant 5.000000e-01 : f32
    %20 = vector.broadcast %cst_10 : f32 to vector<8x128xf32>
    %21 = arith.mulf %20, %19 : vector<8x128xf32>
    %22 = arith.addf %8, %21 : vector<8x128xf32>
    %23 = tpu.iota {dimensions = array<i32: 0>} : vector<8x128xi32>
    %24 = tpu.iota {dimensions = array<i32: 1>} : vector<8x128xi32>
    %c8_i32 = arith.constant 8 : i32
    %25 = arith.muli %arg0, %c8_i32 : i32
    %26 = vector.broadcast %25 : i32 to vector<8x128xi32>
    %27 = arith.addi %26, %23 : vector<8x128xi32>
    %c128_i32 = arith.constant 128 : i32
    %28 = vector.broadcast %c128_i32 : i32 to vector<8x128xi32>
    %29 = arith.muli %27, %28 : vector<8x128xi32>
    %30 = arith.addi %29, %24 : vector<8x128xi32>
    %c0_11 = arith.constant 0 : index
    %31 = memref.load %arg1[%c0_11] : memref<1xi32, #tpu.memory_space<smem>>
    %32 = vector.broadcast %31 : i32 to vector<8x128xi32>
    %33 = arith.cmpi slt, %30, %32 : vector<8x128xi32>
    %cst_12 = arith.constant 0.000000e+00 : f32
    %34 = vector.broadcast %cst_12 : f32 to vector<8x128xf32>
    %35 = arith.select %33, %22, %34 : vector<8x128xi1>, vector<8x128xf32>
    %cst_13 = arith.constant dense<0.000000e+00> : vector<128xf32>
    %36 = vector.multi_reduction <add>, %35, %cst_13 [0] : vector<8x128xf32> to vector<128xf32>
    %37 = vector.shape_cast %36 : vector<128xf32> to vector<1x128xf32>
    %38 = tpu.iota {dimensions = array<i32: 0>} : vector<8x128xi32>
    %c0_i32 = arith.constant 0 : i32
    %39 = vector.broadcast %c0_i32 : i32 to vector<8x128xi32>
    %40 = arith.cmpi eq, %38, %39 : vector<8x128xi32>
    %cst_14 = arith.constant 0.000000e+00 : f32
    %41 = vector.shape_cast %37 : vector<1x128xf32> to vector<1x128xf32>
    %42 = vector.broadcast %41 : vector<1x128xf32> to vector<8x128xf32>
    %43 = vector.broadcast %cst_14 : f32 to vector<8x128xf32>
    %44 = arith.select %40, %42, %43 : vector<8x128xi1>, vector<8x128xf32>
    %c0_15 = arith.constant 0 : index
    %c0_16 = arith.constant 0 : index
    %45 = vector.load %arg3[%c0_15, %c0_16] : memref<8x128xf32, #tpu.memory_space<vmem>>, vector<8x128xf32>
    tpu.vector_store %arg3[%c0_15, %c0_16], %44 {strides = array<i32>} : memref<8x128xf32, #tpu.memory_space<vmem>>, vector<8x128xf32>,
    return
  }
  func.func @transform_0(%arg0: i32, %arg1: memref<1xi32, #tpu.memory_space<smem>>) -> (i32, i32, i32) {
    %c0_i32 = arith.constant 0 : i32
    %c0_i32_0 = arith.constant 0 : i32
    %c0_i32_1 = arith.constant 0 : i32
    return %c0_i32, %arg0, %c0_i32_0 : i32, i32, i32
  }
  func.func @transform_1(%arg0: i32, %arg1: memref<1xi32, #tpu.memory_space<smem>>) -> (i32, i32) {
    %c0_i32 = arith.constant 0 : i32
    %c0_i32_0 = arith.constant 0 : i32
    return %arg0, %c0_i32 : i32, i32
  }
}

</mosaic_0001>

<llo_original>
// kernel: discriminator_loss_forward.1
$region0: #{discriminator_loss_forward.1}
  #allocation0 [shape = 'u32[]', space=smem, size = 0x4, offset = 0x4, fixed_abs, tag = 'smem constant byte address 0x4 - core index']
  #allocation1 [shape = 'u32[144,128]{1,0:T(1,128)}', space=vmem, size = 0x12000, scoped, tag = 'internal scratch']
  #allocation2 [shape = 's32[1]{0}', space=sflag, size = 0x4, scoped, tag = 'scoped memory for discriminator_loss_forward.1']
  #allocation3 [shape = 's32[1]{0:T(128)S(6)}', space=smem, size = 0x200, scoped, tag = 'prefetched SMEM operand 0']
  %s0 = inlined_call_operand.<no memory space> [shape: s32[1], index: 0, kind: input, shape index: {}]
  %s1 = inlined_call_operand.vmem [shape: f32[3,8,128], index: 1, kind: input, shape index: {}]
  %s2 = inlined_call_operand.vmem [shape: f32[8,128], index: 2, kind: output, shape index: {}]
  %s3 = sld [smem:[#allocation0]]
  $region14: #{discriminator_loss_forward.1} parent=0
    _
  %s5 = ssub.s32 1, %s3
  %s6 = scalar_select 0, %s5, %s3
  %7 = sst [smem:[#allocation3]] %s0
  // Predicated region
  $region2: #{discriminator_loss_forward.1} parent=0 // pred_check
    _
  $region3: #{discriminator_loss_forward.1} parent=0 // pred_check_branch
    %9 = sbr.rel (0) target = $region5
  $region4: #{discriminator_loss_forward.1} parent=0 // pred_region
    _
  $region5: #{discriminator_loss_forward.1} parent=0 // pred_fallthru
    _
  %v10 = vld [vmem:[%s1] sm:$0xff]
  %s11 = scalar_lea.vmem %s1, 8
  %v12 = vld [vmem:[%s11] sm:$0xff]
  %s13 = scalar_lea.vmem %s1, 16
  %v14 = vld [vmem:[%s13] sm:$0xff]
  %v15 = vlog2.pop %v10
  %v16 = vmul.f32 %v15, 0.6931472
  %v17 = vmax.f32 %v16, -100.0
  %v18 = vsub.f32 1.0, %v12
  %v19 = vlog2.pop %v18
  %v20 = vmul.f32 %v19, 0.6931472
  %v21 = vmax.f32 %v20, -100.0
  %v22 = vsub.f32 1.0, %v14
  %v23 = vlog2.pop %v22
  %v24 = vmul.f32 %v23, 0.6931472
  %v25 = vmax.f32 %v24, -100.0
  %v26 = vadd.f32 %v21, %v25
  %v27 = vmul.f32 %v26, 0.5
  %v28 = vadd.f32 %v17, %v27
  %v29 = vlaneseq
  %v30 = vshrl.u32 %v29, 7
  %v31 = vlaneseq
  %v32 = vand.u32 %v31, 127
  %s33 = smul.u32 0, 8
  %v34 = vstv %s33
  %v35 = vadd.s32 %v34, %v30
  %v36 = vmul.u32 %v35, 128
  %v37 = vadd.s32 %v36, %v32
  %s38 = sld [smem:[#allocation3]]
  %v39 = vstv %s38
  %vm40 = vcmp.lt.s32.totalorder %v37, %v39
  %v41 = vsel %vm40, %v28, 0.0
  %v42 = vrot.slane %v41, 4
  %v43 = vadd.f32 %v41, %v42
  %v44 = vrot.slane %v43, 2
  %v45 = vadd.f32 %v43, %v44
  %v46 = vrot.slane %v45, 1
  %v47 = vadd.f32 %v45, %v46
  %vm48 = vcmp.eq.s32.totalorder %v30, 0
  %v49 = vsel %vm48, %v47, 0.0
  %50 = vst [vmem:[%s2] sm:$0xff] %v49
  // Predicated region
  $region6: #{discriminator_loss_forward.1} parent=0 // pred_check
    _
  $region7: #{discriminator_loss_forward.1} parent=0 // pred_check_branch
    %52 = sbr.rel (0) target = $region9
  $region8: #{discriminator_loss_forward.1} parent=0 // pred_region
    _
  $region9: #{discriminator_loss_forward.1} parent=0 // pred_fallthru
    _
  // Predicated region
  $region10: #{discriminator_loss_forward.1} parent=0 // pred_check
    _
  $region11: #{discriminator_loss_forward.1} parent=0 // pred_check_branch
    %54 = sbr.rel (0) target = $region13
  $region12: #{discriminator_loss_forward.1} parent=0 // pred_region
    _
  $region13: #{discriminator_loss_forward.1} parent=0 // pred_fallthru
    _

</llo_original>
